<compile_context>
chip_gen: v7x
topology: tpu7x:2x2x1
jax: 0.10.0
libtpu: 0.0.40
codegen_flags: <defaults>
</compile_context>

<pallas_src>
import jax
import jax.numpy as jnp
from jax.experimental import pallas as pl
from jax.experimental.pallas import tpu as pltpu

CIFAR_MEAN = [0.4914, 0.4822, 0.4465]
CIFAR_STD = [0.247, 0.2435, 0.2616]


def get_cifar_params(resol, dtype=jnp.float32):
    """Replicates utils/normalize.get_cifar_params: (1, 3, resol, resol) planes."""
    mean = jnp.stack(
        [jnp.full((resol, resol), CIFAR_MEAN[i], dtype=dtype) for i in range(3)]
    )[None, ...]
    std = jnp.stack(
        [jnp.full((resol, resol), CIFAR_STD[i], dtype=dtype) for i in range(3)]
    )[None, ...]
    return mean, std


def _normalize_kernel(x_ref, scale_ref, bias_ref, o_ref):
    # (bn, CHW) * (1, CHW) + (1, CHW): lane-aligned VPU fused mul+add in f32,
    # cast once on the way out.
    x = x_ref[...].astype(jnp.float32)
    o_ref[...] = (x * scale_ref[...] + bias_ref[...]).astype(o_ref.dtype)


def _choose_block_rows(rows, row_bytes, vmem_budget_bytes=16 << 20):
    """Pick a block row count from a VMEM byte budget.

    Double-buffered input + output blocks -> 4 * block_bytes must fit the
    budget.  16 MiB is safe on every generation's scoped-VMEM default and
    yields ~4 MiB blocks at CIFAR geometry (the v6e/v7x sweet spot).
    """
    max_rows = max(int(vmem_budget_bytes) // (4 * int(row_bytes)), 1)
    bn = min(rows, max_rows)
    if rows >= 16:
        # At least two grid steps so both v7x TensorCores get work.
        bn = min(bn, (rows + 1) // 2)
    if bn < rows:
        # Second-minor block dim must be a multiple of 8 (or the full extent).
        bn = max((bn // 8) * 8, 8)
        bn = min(bn, rows)
    return bn


def cifar_normalize(x, scale_row, bias_row):
    """x: (N, C, H, W); scale_row/bias_row: (1, C*H*W) f32 folded constants."""
    N, C, H, W = x.shape
    chw = C * H * W
    assert scale_row.shape == (1, chw) and bias_row.shape == (1, chw)

    dtype = x.dtype
    itemsize = jnp.dtype(dtype).itemsize

    # Lane-dense 2-D view (row-major reshape, no data movement).
    x2 = x.reshape(N, chw)

    bn = _choose_block_rows(N, chw * itemsize)
    grid = (pl.cdiv(N, bn),)

    x_spec = pl.BlockSpec((bn, chw), lambda i: (i, 0))
    # Constant block index -> scale/bias stay resident in VMEM across the grid.
    row_spec = pl.BlockSpec((1, chw), lambda i: (0, 0))
    out_spec = pl.BlockSpec((bn, chw), lambda i: (i, 0))

    # Explicit VMEM limit: double-buffered in/out blocks + resident rows + slack.
    block_bytes = bn * chw * itemsize
    resident_bytes = 2 * 2 * chw * 4  # scale + bias rows (f32), 2 buffers each
    needed = 4 * block_bytes + resident_bytes + (1 << 20)
    vmem_limit = min(max(needed, 16 << 20), 48 << 20)

    out2 = pl.pallas_call(
        _normalize_kernel,
        out_shape=jax.ShapeDtypeStruct((N, chw), dtype),
        grid_spec=pltpu.PrefetchScalarGridSpec(
            num_scalar_prefetch=0,
            grid=grid,
            in_specs=[x_spec, row_spec, row_spec],
            out_specs=out_spec,
        ),
        compiler_params=pltpu.CompilerParams(
            dimension_semantics=("parallel",),
            vmem_limit_bytes=int(vmem_limit),
        ),
    )(x2, scale_row, bias_row)

    return out2.reshape(N, C, H, W)


class CIFARNORMALIZE:
    """JAX/Pallas equivalent of the PyTorch CIFARNORMALIZE module."""

    def __init__(self, resol):
        self.mean, self.std = get_cifar_params(resol)
        # Fold (x - mean) / std -> x * inv_std + bias, once, in f32, using the
        # full per-pixel planes (correct even if planes were not channel-const).
        inv_std = 1.0 / self.std.astype(jnp.float32)
        self._scale_row = inv_std.reshape(1, -1)                               # (1, C*R*R)
        self._bias_row = (-self.mean.astype(jnp.float32) * inv_std).reshape(1, -1)

    def __call__(self, x):
        # TODO(synk): at true CIFAR sizes this op is dispatch-bound; ideally it
        # would be fused into the consumer rather than run standalone.
        return cifar_normalize(x, self._scale_row, self._bias_row)


if __name__ == "__main__":
    key = jax.random.PRNGKey(0)
    # Small CIFAR-like input: batch=2, channels=3 (RGB), spatial=32.
    N, C, H, W = 2, 3, 32, 32
    x = jax.random.uniform(key, (N, C, H, W), dtype=jnp.float32)

    module = CIFARNORMALIZE(H)
    out = module(x)
    out = jax.block_until_ready(out)

    # Reference check in plain JAX (same broadcast semantics as PyTorch).
    ref = (x - module.mean) / module.std
    assert out.shape == (N, C, H, W)
    assert jnp.allclose(out, ref, atol=1e-5, rtol=1e-5)

    print("KERNEL_OK")
</pallas_src>

<mosaic_0001>
module attributes {stable_mosaic.version = 11 : i64} {
  func.func @_normalize_kernel(%arg0: i32, %arg1: memref<2x3072xf32, #tpu.memory_space<vmem>>, %arg2: memref<1x3072xf32, #tpu.memory_space<vmem>>, %arg3: memref<1x3072xf32, #tpu.memory_space<vmem>>, %arg4: memref<2x3072xf32, #tpu.memory_space<vmem>>) attributes {dimension_semantics = [#tpu.dimension_semantics<parallel>], iteration_bounds = array<i64: 1>, scalar_prefetch = 0 : i64, scratch_operands = 0 : i64, tpu.core_type = #tpu.core_type<tc>, window_params = [{transform_indices = @transform_0, window_bounds = array<i64: 2, 3072>}, {pipeline_mode = #tpu.pipeline_mode<synchronous>, transform_indices = @transform_1, window_bounds = array<i64: 1, 3072>}, {pipeline_mode = #tpu.pipeline_mode<synchronous>, transform_indices = @transform_2, window_bounds = array<i64: 1, 3072>}, {transform_indices = @transform_3, window_bounds = array<i64: 2, 3072>}]} {
    %c0 = arith.constant 0 : index
    %c0_0 = arith.constant 0 : index
    %0 = vector.load %arg1[%c0, %c0_0] : memref<2x3072xf32, #tpu.memory_space<vmem>>, vector<2x3072xf32>
    %c0_1 = arith.constant 0 : index
    %c0_2 = arith.constant 0 : index
    %1 = vector.load %arg2[%c0_1, %c0_2] : memref<1x3072xf32, #tpu.memory_space<vmem>>, vector<1x3072xf32>
    %2 = vector.broadcast %1 : vector<1x3072xf32> to vector<2x3072xf32>
    %3 = arith.mulf %0, %2 : vector<2x3072xf32>
    %c0_3 = arith.constant 0 : index
    %c0_4 = arith.constant 0 : index
    %4 = vector.load %arg3[%c0_3, %c0_4] : memref<1x3072xf32, #tpu.memory_space<vmem>>, vector<1x3072xf32>
    %5 = vector.broadcast %4 : vector<1x3072xf32> to vector<2x3072xf32>
    %6 = arith.addf %3, %5 : vector<2x3072xf32>
    %c0_5 = arith.constant 0 : index
    %c0_6 = arith.constant 0 : index
    %7 = vector.load %arg4[%c0_5, %c0_6] : memref<2x3072xf32, #tpu.memory_space<vmem>>, vector<2x3072xf32>
    tpu.vector_store %arg4[%c0_5, %c0_6], %6 {strides = array<i32>} : memref<2x3072xf32, #tpu.memory_space<vmem>>, vector<2x3072xf32>,
    return
  }
  func.func @transform_0(%arg0: i32) -> (i32, i32) {
    %c0_i32 = arith.constant 0 : i32
    %c0_i32_0 = arith.constant 0 : i32
    return %arg0, %c0_i32 : i32, i32
  }
  func.func @transform_1(%arg0: i32) -> (i32, i32) {
    %c0_i32 = arith.constant 0 : i32
    %c0_i32_0 = arith.constant 0 : i32
    %c0_i32_1 = arith.constant 0 : i32
    return %c0_i32, %c0_i32_0 : i32, i32
  }
  func.func @transform_2(%arg0: i32) -> (i32, i32) {
    %c0_i32 = arith.constant 0 : i32
    %c0_i32_0 = arith.constant 0 : i32
    %c0_i32_1 = arith.constant 0 : i32
    return %c0_i32, %c0_i32_0 : i32, i32
  }
  func.func @transform_3(%arg0: i32) -> (i32, i32) {
    %c0_i32 = arith.constant 0 : i32
    %c0_i32_0 = arith.constant 0 : i32
    return %arg0, %c0_i32 : i32, i32
  }
}

</mosaic_0001>

<llo_original>
// kernel: tpu_custom_call.1
$region0: #{tpu_custom_call.1}
  #allocation0 [shape = 'u32[]', space=smem, size = 0x4, offset = 0x4, fixed_abs, tag = 'smem constant byte address 0x4 - core index']
  #allocation1 [shape = 'u32[144,128]{1,0:T(1,128)}', space=vmem, size = 0x12000, scoped, tag = 'internal scratch']
  %s0 = inlined_call_operand.hbm [shape: f32[2,3072], index: 0, kind: input, shape index: {}]
  %s1 = inlined_call_operand.hbm [shape: f32[1,3072], index: 1, kind: input, shape index: {}]
  %s2 = inlined_call_operand.hbm [shape: f32[1,3072], index: 2, kind: input, shape index: {}]
  %s3 = inlined_call_operand.hbm [shape: f32[2,3072], index: 3, kind: output, shape index: {}]
  %s4 = sld [smem:[#allocation0]]
  $region34: #{tpu_custom_call.1} parent=0
    _
  %s6 = ssub.s32 1, %s4
  %s7 = scalar_select 0, %s6, %s4
  $region1: #{tpu_custom_call.1} parent=0
    #allocation2 [shape = 'u8[24576]{0}', space=vmem, size = 0x6000, scoped, tag = 'input window, operand 0, single buffered']
    #allocation3 [shape = 's32[1]{0}', space=sflag, size = 0x4, scoped, tag = 'scoped memory for tpu_custom_call.1']
    #allocation4 [shape = 's32[1]{0}', space=sflag, size = 0x4, scoped, tag = 'scoped memory for tpu_custom_call.1']
    #allocation5 [shape = 'u8[12288]{0}', space=vmem, size = 0x3000, scoped, tag = 'input window, operand 1, single buffered']
    #allocation6 [shape = 's32[1]{0}', space=sflag, size = 0x4, scoped, tag = 'scoped memory for tpu_custom_call.1']
    #allocation7 [shape = 'u8[12288]{0}', space=vmem, size = 0x3000, scoped, tag = 'input window, operand 2, single buffered']
    #allocation8 [shape = 'u8[24576]{0}', space=vmem, size = 0x6000, scoped, tag = 'output window, operand 0, single buffered']
    %8 = vsyncpa [#allocation3], 0
    %9 = vsyncpa [#allocation6], 0
    %10 = vsyncpa [#allocation4], 0
    // Predicated region
    $region2: #{tpu_custom_call.1} parent=1 // pred_check
      _
    $region3: #{tpu_custom_call.1} parent=1 // pred_check_branch
      %12 = sbr.rel (0) target = $region5
    $region4: #{tpu_custom_call.1} parent=1 // pred_region
      %s14 = ssub.s32 768, 768
      %15 = vsyncadd [#allocation3], %s14
      %s17 = sshll.u32 [#allocation2], 4
      %s18 = int_to_ptr.vmem [resolvable:$true] %s17
      %20 = dma.hbm_to_vmem [thread:$0]  %s0, 768, %s18, [#allocation3]
    $region5: #{tpu_custom_call.1} parent=1 // pred_fallthru
      _
    // Predicated region
    $region6: #{tpu_custom_call.1} parent=1 // pred_check
      _
    $region7: #{tpu_custom_call.1} parent=1 // pred_check_branch
      %22 = sbr.rel (0) target = $region9
    $region8: #{tpu_custom_call.1} parent=1 // pred_region
      %s24 = ssub.s32 384, 384
      %25 = vsyncadd [#allocation6], %s24
      %s27 = sshll.u32 [#allocation5], 4
      %s28 = int_to_ptr.vmem [resolvable:$true] %s27
      %30 = dma.hbm_to_vmem [thread:$0]  %s1, 384, %s28, [#allocation6]
    $region9: #{tpu_custom_call.1} parent=1 // pred_fallthru
      _
    // Predicated region
    $region10: #{tpu_custom_call.1} parent=1 // pred_check
      _
    $region11: #{tpu_custom_call.1} parent=1 // pred_check_branch
      %32 = sbr.rel (0) target = $region13
    $region12: #{tpu_custom_call.1} parent=1 // pred_region
      %s34 = ssub.s32 384, 384
      %35 = vsyncadd [#allocation6], %s34
      %s37 = sshll.u32 [#allocation7], 4
      %s38 = int_to_ptr.vmem [resolvable:$true] %s37
      %40 = dma.hbm_to_vmem [thread:$0]  %s2, 384, %s38, [#allocation6]
    $region13: #{tpu_custom_call.1} parent=1 // pred_fallthru
      _
    // Predicated region
    $region14: #{tpu_custom_call.1} parent=1 // pred_check
      _
    $region15: #{tpu_custom_call.1} parent=1 // pred_check_branch
      %42 = sbr.rel (0) target = $region17
    $region16: #{tpu_custom_call.1} parent=1 // pred_region
      %43 = dma.done [#allocation3], 768
    $region17: #{tpu_custom_call.1} parent=1 // pred_fallthru
      _
    // Predicated region
    $region18: #{tpu_custom_call.1} parent=1 // pred_check
      _
    $region19: #{tpu_custom_call.1} parent=1 // pred_check_branch
      %45 = sbr.rel (0) target = $region21
    $region20: #{tpu_custom_call.1} parent=1 // pred_region
      %46 = dma.done [#allocation6], 384
    $region21: #{tpu_custom_call.1} parent=1 // pred_fallthru
      _
    // Predicated region
    $region22: #{tpu_custom_call.1} parent=1 // pred_check
      _
    $region23: #{tpu_custom_call.1} parent=1 // pred_check_branch
      %48 = sbr.rel (0) target = $region25
    $region24: #{tpu_custom_call.1} parent=1 // pred_region
      %49 = dma.done [#allocation6], 384
    $region25: #{tpu_custom_call.1} parent=1 // pred_fallthru
      _
    %v50 = vld [vmem:[#allocation2] sm:$0xff]
    %v51 = vld [vmem:[#allocation2 + $0x8] sm:$0xff]
    %v52 = vld [vmem:[#allocation2 + $0x10] sm:$0xff]
    %v53 = vld [vmem:[#allocation2 + $0x18] sm:$0xff]
    %v54 = vld [vmem:[#allocation2 + $0x20] sm:$0xff]
    %v55 = vld [vmem:[#allocation2 + $0x28] sm:$0xff]
    %v56 = vld [vmem:[#allocation5] sm:$0xff]
    %v57 = vld [vmem:[#allocation5 + $0x8] sm:$0xff]
    %v58 = vld [vmem:[#allocation5 + $0x10] sm:$0xff]
    %v62 = vlaneseq
    %v63 = vshrl.u32 %v62, 7
    %v64 = vsub.s32 0, %v63
    %v65 = vrot.slane %v56, %v64
    %v66 = vlaneseq
    %v67 = vshrl.u32 %v66, 7
    %v68 = vsub.s32 1, %v67
    %v69 = vrot.slane %v56, %v68
    %v70 = vlaneseq
    %v71 = vshrl.u32 %v70, 7
    %v72 = vsub.s32 2, %v71
    %v73 = vrot.slane %v56, %v72
    %v74 = vlaneseq
    %v75 = vshrl.u32 %v74, 7
    %v76 = vsub.s32 3, %v75
    %v77 = vrot.slane %v56, %v76
    %v78 = vlaneseq
    %v79 = vshrl.u32 %v78, 7
    %v80 = vsub.s32 4, %v79
    %v81 = vrot.slane %v56, %v80
    %v82 = vlaneseq
    %v83 = vshrl.u32 %v82, 7
    %v84 = vsub.s32 5, %v83
    %v85 = vrot.slane %v56, %v84
    %v86 = vlaneseq
    %v87 = vshrl.u32 %v86, 7
    %v88 = vsub.s32 6, %v87
    %v89 = vrot.slane %v56, %v88
    %v90 = vlaneseq
    %v91 = vshrl.u32 %v90, 7
    %v92 = vsub.s32 7, %v91
    %v93 = vrot.slane %v56, %v92
    %v94 = vlaneseq
    %v95 = vshrl.u32 %v94, 7
    %v96 = vsub.s32 0, %v95
    %v97 = vrot.slane %v57, %v96
    %v98 = vlaneseq
    %v99 = vshrl.u32 %v98, 7
    %v100 = vsub.s32 1, %v99
    %v101 = vrot.slane %v57, %v100
    %v102 = vlaneseq
    %v103 = vshrl.u32 %v102, 7
    %v104 = vsub.s32 2, %v103
    %v105 = vrot.slane %v57, %v104
    %v106 = vlaneseq
    %v107 = vshrl.u32 %v106, 7
    %v108 = vsub.s32 3, %v107
    %v109 = vrot.slane %v57, %v108
    %v110 = vlaneseq
    %v111 = vshrl.u32 %v110, 7
    %v112 = vsub.s32 4, %v111
    %v113 = vrot.slane %v57, %v112
    %v114 = vlaneseq
    %v115 = vshrl.u32 %v114, 7
    %v116 = vsub.s32 5, %v115
    %v117 = vrot.slane %v57, %v116
    %v118 = vlaneseq
    %v119 = vshrl.u32 %v118, 7
    %v120 = vsub.s32 6, %v119
    %v121 = vrot.slane %v57, %v120
    %v122 = vlaneseq
    %v123 = vshrl.u32 %v122, 7
    %v124 = vsub.s32 7, %v123
    %v125 = vrot.slane %v57, %v124
    %v126 = vlaneseq
    %v127 = vshrl.u32 %v126, 7
    %v128 = vsub.s32 0, %v127
    %v129 = vrot.slane %v58, %v128
    %v130 = vlaneseq
    %v131 = vshrl.u32 %v130, 7
    %v132 = vsub.s32 1, %v131
    %v133 = vrot.slane %v58, %v132
    %v134 = vlaneseq
    %v135 = vshrl.u32 %v134, 7
    %v136 = vsub.s32 2, %v135
    %v137 = vrot.slane %v58, %v136
    %v138 = vlaneseq
    %v139 = vshrl.u32 %v138, 7
    %v140 = vsub.s32 3, %v139
    %v141 = vrot.slane %v58, %v140
    %v142 = vlaneseq
    %v143 = vshrl.u32 %v142, 7
    %v144 = vsub.s32 4, %v143
    %v145 = vrot.slane %v58, %v144
    %v146 = vlaneseq
    %v147 = vshrl.u32 %v146, 7
    %v148 = vsub.s32 5, %v147
    %v149 = vrot.slane %v58, %v148
    %v150 = vlaneseq
    %v151 = vshrl.u32 %v150, 7
    %v152 = vsub.s32 6, %v151
    %v153 = vrot.slane %v58, %v152
    %v154 = vlaneseq
    %v155 = vshrl.u32 %v154, 7
    %v156 = vsub.s32 7, %v155
    %v157 = vrot.slane %v58, %v156
    %v158 = vcombine.low %v65, %v69
    %v159 = vcombine.low %v73, %v77
    %v161 = vunpack.c.l.s4 1983009808
    %v162 = vunpack.c.0.s8 %v161
    %v163 = vlaneseq
    %v164 = vshrl.u32 %v163, 7
    %v165 = vsub.s32 %v162, %v164
    %v166 = vrot.slane %v158, %v165
    %v168 = vunpack.c.l.s4 1983009808
    %v169 = vunpack.c.0.s8 %v168
    %v170 = vlaneseq
    %v171 = vshrl.u32 %v170, 7
    %v172 = vsub.s32 %v169, %v171
    %v173 = vrot.slane %v159, %v172
    %v174 = vcombine.low %v166, %v173
    %v175 = vcombine.low %v81, %v85
    %v176 = vcombine.low %v89, %v93
    %v178 = vunpack.c.l.s4 1983009808
    %v179 = vunpack.c.0.s8 %v178
    %v180 = vlaneseq
    %v181 = vshrl.u32 %v180, 7
    %v182 = vsub.s32 %v179, %v181
    %v183 = vrot.slane %v175, %v182
    %v185 = vunpack.c.l.s4 1983009808
    %v186 = vunpack.c.0.s8 %v185
    %v187 = vlaneseq
    %v188 = vshrl.u32 %v187, 7
    %v189 = vsub.s32 %v186, %v188
    %v190 = vrot.slane %v176, %v189
    %v191 = vcombine.low %v183, %v190
    %v192 = vcombine.low %v97, %v101
    %v193 = vcombine.low %v105, %v109
    %v195 = vunpack.c.l.s4 1983009808
    %v196 = vunpack.c.0.s8 %v195
    %v197 = vlaneseq
    %v198 = vshrl.u32 %v197, 7
    %v199 = vsub.s32 %v196, %v198
    %v200 = vrot.slane %v192, %v199
    %v202 = vunpack.c.l.s4 1983009808
    %v203 = vunpack.c.0.s8 %v202
    %v204 = vlaneseq
    %v205 = vshrl.u32 %v204, 7
    %v206 = vsub.s32 %v203, %v205
    %v207 = vrot.slane %v193, %v206
    %v208 = vcombine.low %v200, %v207
    %v209 = vcombine.low %v113, %v117
    %v210 = vcombine.low %v121, %v125
    %v212 = vunpack.c.l.s4 1983009808
    %v213 = vunpack.c.0.s8 %v212
    %v214 = vlaneseq
    %v215 = vshrl.u32 %v214, 7
    %v216 = vsub.s32 %v213, %v215
    %v217 = vrot.slane %v209, %v216
    %v219 = vunpack.c.l.s4 1983009808
    %v220 = vunpack.c.0.s8 %v219
    %v221 = vlaneseq
    %v222 = vshrl.u32 %v221, 7
    %v223 = vsub.s32 %v220, %v222
    %v224 = vrot.slane %v210, %v223
    %v225 = vcombine.low %v217, %v224
    %v226 = vcombine.low %v129, %v133
    %v227 = vcombine.low %v137, %v141
    %v229 = vunpack.c.l.s4 1983009808
    %v230 = vunpack.c.0.s8 %v229
    %v231 = vlaneseq
    %v232 = vshrl.u32 %v231, 7
    %v233 = vsub.s32 %v230, %v232
    %v234 = vrot.slane %v226, %v233
    %v236 = vunpack.c.l.s4 1983009808
    %v237 = vunpack.c.0.s8 %v236
    %v238 = vlaneseq
    %v239 = vshrl.u32 %v238, 7
    %v240 = vsub.s32 %v237, %v239
    %v241 = vrot.slane %v227, %v240
    %v242 = vcombine.low %v234, %v241
    %v243 = vcombine.low %v145, %v149
    %v244 = vcombine.low %v153, %v157
    %v246 = vunpack.c.l.s4 1983009808
    %v247 = vunpack.c.0.s8 %v246
    %v248 = vlaneseq
    %v249 = vshrl.u32 %v248, 7
    %v250 = vsub.s32 %v247, %v249
    %v251 = vrot.slane %v243, %v250
    %v253 = vunpack.c.l.s4 1983009808
    %v254 = vunpack.c.0.s8 %v253
    %v255 = vlaneseq
    %v256 = vshrl.u32 %v255, 7
    %v257 = vsub.s32 %v254, %v256
    %v258 = vrot.slane %v244, %v257
    %v259 = vcombine.low %v251, %v258
    %v266 = vmul.f32 %v50, %v174
    %v267 = vmul.f32 %v51, %v191
    %v268 = vmul.f32 %v52, %v208
    %v269 = vmul.f32 %v53, %v225
    %v270 = vmul.f32 %v54, %v242
    %v271 = vmul.f32 %v55, %v259
    %v272 = vld [vmem:[#allocation7] sm:$0xff]
    %v273 = vld [vmem:[#allocation7 + $0x8] sm:$0xff]
    %v274 = vld [vmem:[#allocation7 + $0x10] sm:$0xff]
    %v278 = vlaneseq
    %v279 = vshrl.u32 %v278, 7
    %v280 = vsub.s32 0, %v279
    %v281 = vrot.slane %v272, %v280
    %v282 = vlaneseq
    %v283 = vshrl.u32 %v282, 7
    %v284 = vsub.s32 1, %v283
    %v285 = vrot.slane %v272, %v284
    %v286 = vlaneseq
    %v287 = vshrl.u32 %v286, 7
    %v288 = vsub.s32 2, %v287
    %v289 = vrot.slane %v272, %v288
    %v290 = vlaneseq
    %v291 = vshrl.u32 %v290, 7
    %v292 = vsub.s32 3, %v291
    %v293 = vrot.slane %v272, %v292
    %v294 = vlaneseq
    %v295 = vshrl.u32 %v294, 7
    %v296 = vsub.s32 4, %v295
    %v297 = vrot.slane %v272, %v296
    %v298 = vlaneseq
    %v299 = vshrl.u32 %v298, 7
    %v300 = vsub.s32 5, %v299
    %v301 = vrot.slane %v272, %v300
    %v302 = vlaneseq
    %v303 = vshrl.u32 %v302, 7
    %v304 = vsub.s32 6, %v303
    %v305 = vrot.slane %v272, %v304
    %v306 = vlaneseq
    %v307 = vshrl.u32 %v306, 7
    %v308 = vsub.s32 7, %v307
    %v309 = vrot.slane %v272, %v308
    %v310 = vlaneseq
    %v311 = vshrl.u32 %v310, 7
    %v312 = vsub.s32 0, %v311
    %v313 = vrot.slane %v273, %v312
    %v314 = vlaneseq
    %v315 = vshrl.u32 %v314, 7
    %v316 = vsub.s32 1, %v315
    %v317 = vrot.slane %v273, %v316
    %v318 = vlaneseq
    %v319 = vshrl.u32 %v318, 7
    %v320 = vsub.s32 2, %v319
    %v321 = vrot.slane %v273, %v320
    %v322 = vlaneseq
    %v323 = vshrl.u32 %v322, 7
    %v324 = vsub.s32 3, %v323
    %v325 = vrot.slane %v273, %v324
    %v326 = vlaneseq
    %v327 = vshrl.u32 %v326, 7
    %v328 = vsub.s32 4, %v327
    %v329 = vrot.slane %v273, %v328
    %v330 = vlaneseq
    %v331 = vshrl.u32 %v330, 7
    %v332 = vsub.s32 5, %v331
    %v333 = vrot.slane %v273, %v332
    %v334 = vlaneseq
    %v335 = vshrl.u32 %v334, 7
    %v336 = vsub.s32 6, %v335
    %v337 = vrot.slane %v273, %v336
    %v338 = vlaneseq
    %v339 = vshrl.u32 %v338, 7
    %v340 = vsub.s32 7, %v339
    %v341 = vrot.slane %v273, %v340
    %v342 = vlaneseq
    %v343 = vshrl.u32 %v342, 7
    %v344 = vsub.s32 0, %v343
    %v345 = vrot.slane %v274, %v344
    %v346 = vlaneseq
    %v347 = vshrl.u32 %v346, 7
    %v348 = vsub.s32 1, %v347
    %v349 = vrot.slane %v274, %v348
    %v350 = vlaneseq
    %v351 = vshrl.u32 %v350, 7
    %v352 = vsub.s32 2, %v351
    %v353 = vrot.slane %v274, %v352
    %v354 = vlaneseq
    %v355 = vshrl.u32 %v354, 7
    %v356 = vsub.s32 3, %v355
    %v357 = vrot.slane %v274, %v356
    %v358 = vlaneseq
    %v359 = vshrl.u32 %v358, 7
    %v360 = vsub.s32 4, %v359
    %v361 = vrot.slane %v274, %v360
    %v362 = vlaneseq
    %v363 = vshrl.u32 %v362, 7
    %v364 = vsub.s32 5, %v363
    %v365 = vrot.slane %v274, %v364
    %v366 = vlaneseq
    %v367 = vshrl.u32 %v366, 7
    %v368 = vsub.s32 6, %v367
    %v369 = vrot.slane %v274, %v368
    %v370 = vlaneseq
    %v371 = vshrl.u32 %v370, 7
    %v372 = vsub.s32 7, %v371
    %v373 = vrot.slane %v274, %v372
    %v374 = vcombine.low %v281, %v285
    %v375 = vcombine.low %v289, %v293
    %v377 = vunpack.c.l.s4 1983009808
    %v378 = vunpack.c.0.s8 %v377
    %v379 = vlaneseq
    %v380 = vshrl.u32 %v379, 7
    %v381 = vsub.s32 %v378, %v380
    %v382 = vrot.slane %v374, %v381
    %v384 = vunpack.c.l.s4 1983009808
    %v385 = vunpack.c.0.s8 %v384
    %v386 = vlaneseq
    %v387 = vshrl.u32 %v386, 7
    %v388 = vsub.s32 %v385, %v387
    %v389 = vrot.slane %v375, %v388
    %v390 = vcombine.low %v382, %v389
    %v391 = vcombine.low %v297, %v301
    %v392 = vcombine.low %v305, %v309
    %v394 = vunpack.c.l.s4 1983009808
    %v395 = vunpack.c.0.s8 %v394
    %v396 = vlaneseq
    %v397 = vshrl.u32 %v396, 7
    %v398 = vsub.s32 %v395, %v397
    %v399 = vrot.slane %v391, %v398
    %v401 = vunpack.c.l.s4 1983009808
    %v402 = vunpack.c.0.s8 %v401
    %v403 = vlaneseq
    %v404 = vshrl.u32 %v403, 7
    %v405 = vsub.s32 %v402, %v404
    %v406 = vrot.slane %v392, %v405
    %v407 = vcombine.low %v399, %v406
    %v408 = vcombine.low %v313, %v317
    %v409 = vcombine.low %v321, %v325
    %v411 = vunpack.c.l.s4 1983009808
    %v412 = vunpack.c.0.s8 %v411
    %v413 = vlaneseq
    %v414 = vshrl.u32 %v413, 7
    %v415 = vsub.s32 %v412, %v414
    %v416 = vrot.slane %v408, %v415
    %v418 = vunpack.c.l.s4 1983009808
    %v419 = vunpack.c.0.s8 %v418
    %v420 = vlaneseq
    %v421 = vshrl.u32 %v420, 7
    %v422 = vsub.s32 %v419, %v421
    %v423 = vrot.slane %v409, %v422
    %v424 = vcombine.low %v416, %v423
    %v425 = vcombine.low %v329, %v333
    %v426 = vcombine.low %v337, %v341
    %v428 = vunpack.c.l.s4 1983009808
    %v429 = vunpack.c.0.s8 %v428
    %v430 = vlaneseq
    %v431 = vshrl.u32 %v430, 7
    %v432 = vsub.s32 %v429, %v431
    %v433 = vrot.slane %v425, %v432
    %v435 = vunpack.c.l.s4 1983009808
    %v436 = vunpack.c.0.s8 %v435
    %v437 = vlaneseq
    %v438 = vshrl.u32 %v437, 7
    %v439 = vsub.s32 %v436, %v438
    %v440 = vrot.slane %v426, %v439
    %v441 = vcombine.low %v433, %v440
    %v442 = vcombine.low %v345, %v349
    %v443 = vcombine.low %v353, %v357
    %v445 = vunpack.c.l.s4 1983009808
    %v446 = vunpack.c.0.s8 %v445
    %v447 = vlaneseq
    %v448 = vshrl.u32 %v447, 7
    %v449 = vsub.s32 %v446, %v448
    %v450 = vrot.slane %v442, %v449
    %v452 = vunpack.c.l.s4 1983009808
    %v453 = vunpack.c.0.s8 %v452
    %v454 = vlaneseq
    %v455 = vshrl.u32 %v454, 7
    %v456 = vsub.s32 %v453, %v455
    %v457 = vrot.slane %v443, %v456
    %v458 = vcombine.low %v450, %v457
    %v459 = vcombine.low %v361, %v365
    %v460 = vcombine.low %v369, %v373
    %v462 = vunpack.c.l.s4 1983009808
    %v463 = vunpack.c.0.s8 %v462
    %v464 = vlaneseq
    %v465 = vshrl.u32 %v464, 7
    %v466 = vsub.s32 %v463, %v465
    %v467 = vrot.slane %v459, %v466
    %v469 = vunpack.c.l.s4 1983009808
    %v470 = vunpack.c.0.s8 %v469
    %v471 = vlaneseq
    %v472 = vshrl.u32 %v471, 7
    %v473 = vsub.s32 %v470, %v472
    %v474 = vrot.slane %v460, %v473
    %v475 = vcombine.low %v467, %v474
    %v482 = vadd.f32 %v266, %v390
    %v483 = vadd.f32 %v267, %v407
    %v484 = vadd.f32 %v268, %v424
    %v485 = vadd.f32 %v269, %v441
    %v486 = vadd.f32 %v270, %v458
    %v487 = vadd.f32 %v271, %v475
    %488 = vst [vmem:[#allocation8] sm:$0xff] %v482
    %489 = vst [vmem:[#allocation8 + $0x8] sm:$0xff] %v483
    %490 = vst [vmem:[#allocation8 + $0x10] sm:$0xff] %v484
    %491 = vst [vmem:[#allocation8 + $0x18] sm:$0xff] %v485
    %492 = vst [vmem:[#allocation8 + $0x20] sm:$0xff] %v486
    %493 = vst [vmem:[#allocation8 + $0x28] sm:$0xff] %v487
    // Predicated region
    $region26: #{tpu_custom_call.1} parent=1 // pred_check
      _
    $region27: #{tpu_custom_call.1} parent=1 // pred_check_branch
      %495 = sbr.rel (0) target = $region29
    $region28: #{tpu_custom_call.1} parent=1 // pred_region
      %s497 = ssub.s32 768, 768
      %498 = vsyncadd [#allocation4], %s497
      %s500 = sshll.u32 [#allocation8], 4
      %s501 = int_to_ptr.vmem [resolvable:$true] %s500
      %503 = dma.vmem_to_hbm [thread:$0]  %s501, 768, %s3, [#allocation4]
    $region29: #{tpu_custom_call.1} parent=1 // pred_fallthru
      _
    // Predicated region
    $region30: #{tpu_custom_call.1} parent=1 // pred_check
      _
    $region31: #{tpu_custom_call.1} parent=1 // pred_check_branch
      %505 = sbr.rel (0) target = $region33
    $region32: #{tpu_custom_call.1} parent=1 // pred_region
      %506 = dma.done [#allocation4], 768
    $region33: #{tpu_custom_call.1} parent=1 // pred_fallthru
      _
    %507 = vsyncpa [#allocation3], 1
    %508 = vsyncpa [#allocation6], 1
    %509 = vsyncpa [#allocation4], 1

</llo_original>
